<compile_context>
chip_gen: v7x
topology: tpu7x:2x2x1
jax: 0.10.0
libtpu: 0.0.40
codegen_flags: <defaults>
</compile_context>

<pallas_src>
import functools

import jax
import jax.numpy as jnp
from jax.experimental import pallas as pl
from jax.experimental.pallas import tpu as pltpu


def _vmem_capacity_bytes():
    """Physical VMEM per TensorCore (128 MiB v5e/v6e, 64 MiB v7x)."""
    try:
        return int(pltpu.get_tpu_info().vmem_capacity_bytes)
    except Exception:
        return 128 * 1024 * 1024


# ---------------------------------------------------------------------------
# Fused kernel (grid=(B,)): one (C, HWp) slab per step, everything in-kernel.
#   pooled -> tiny MLP -> cSE gate (C,1); sSE = sigmoid(ws @ x); out = x*(cse+sse)
# ---------------------------------------------------------------------------
def _scse_fused_kernel(x_ref, w1t_ref, b1_ref, w2t_ref, b2_ref, ws_ref, bs_ref,
                       o_ref, *, inv_hw):
    x = x_ref[...]                                              # (C, HWp) native dtype
    xf = x.astype(jnp.float32)
    # Global average pool over the true HW (padded tail columns are zero).
    pooled = jnp.sum(xf, axis=1, keepdims=True) * inv_hw        # (C, 1)
    # cSE MLP kept column-oriented -> no cross-lane transposes.
    h = jnp.dot(w1t_ref[...], pooled,
                preferred_element_type=jnp.float32) + b1_ref[...]   # (Cr, 1)
    h = jnp.maximum(h, 0.0)
    g = jnp.dot(w2t_ref[...], h,
                preferred_element_type=jnp.float32) + b2_ref[...]   # (C, 1)
    cse = jax.nn.sigmoid(g)                                     # (C, 1)
    # sSE: lane-dense (1, HWp) row through the otherwise-idle MXU.
    sse = jax.nn.sigmoid(
        jnp.dot(ws_ref[...].astype(x.dtype), x,
                preferred_element_type=jnp.float32) + bs_ref[0, 0])  # (1, HWp)
    o_ref[...] = (xf * (cse + sse)).astype(o_ref.dtype)


# ---------------------------------------------------------------------------
# Tiled fallback kernel: per (batch, HW-tile) block of x in (C, T) layout.
#   sse = sigmoid(ws_row @ x + bs)   (1, T) lane-dense
#   out = x * (cse + sse)            (C, T)
# ---------------------------------------------------------------------------
def _scse_spatial_kernel(x_ref, cse_ref, ws_ref, bs_ref, o_ref):
    x = x_ref[...]                                              # (C, T)
    sse = jax.nn.sigmoid(
        jnp.dot(ws_ref[...].astype(x.dtype), x,
                preferred_element_type=jnp.float32) + bs_ref[0, 0])  # (1, T)
    gate = cse_ref[...] + sse                                   # (C,1)+(1,T) -> (C,T)
    o_ref[...] = (x.astype(jnp.float32) * gate).astype(o_ref.dtype)


def _pick_spatial_tile(hwp, c, target_f32_bytes):
    """Largest multiple of 128 dividing hwp with C*T*4 <= target (hwp % 128 == 0)."""
    max_t = max(128, (target_f32_bytes // max(1, c * 4)) // 128 * 128)
    t = min(hwp, max_t)
    while hwp % t != 0:
        t -= 128
    return max(t, 128)


def scse_attention(x_nchw, w1t, b1, w2t, b2, ws_row, bs, *, force_fused=None):
    """SCSE forward. x_nchw: (B, C, H, W). Conv-1x1 weights in PyTorch (out, in) layout."""
    B, C, H, W = x_nchw.shape
    HW = H * W
    Cr = w1t.shape[0]
    x = x_nchw.reshape(B, C, HW)                       # free reshape, no transpose
    itemsize = jnp.dtype(x.dtype).itemsize

    # Lane-dense spatial axis: pad HW up to a multiple of 128 (pad, run, slice).
    HWp = ((HW + 127) // 128) * 128
    x_p = x if HWp == HW else jnp.pad(x, ((0, 0), (0, 0), (0, HWp - HW)))

    cap = _vmem_capacity_bytes()                       # 128 MiB v5e/v6e, 64 MiB v7x
    vmem_ceiling = min(64 * 1024 * 1024, cap // 2)     # <= 32 MiB on v7x
    blk_target_f32 = max(1 << 20, cap // 32)           # ~4 MiB v5e/v6e, ~2 MiB v7x

    slab_f32 = C * HWp * 4
    use_fused = (slab_f32 <= blk_target_f32) if force_fused is None else force_fused

    if use_fused:
        # --- single fused pass: read x once, write out once ---
        vmem_limit = int(min(vmem_ceiling, max(8 * 1024 * 1024, 8 * slab_f32)))
        out = pl.pallas_call(
            functools.partial(_scse_fused_kernel, inv_hw=1.0 / HW),
            out_shape=jax.ShapeDtypeStruct((B, C, HWp), x.dtype),
            grid_spec=pltpu.PrefetchScalarGridSpec(
                num_scalar_prefetch=0,
                grid=(B,),
                in_specs=[
                    pl.BlockSpec((None, C, HWp), lambda b: (b, 0, 0)),   # x slab
                    pl.BlockSpec((Cr, C), lambda b: (0, 0)),             # cSE conv1 w
                    pl.BlockSpec((Cr, 1), lambda b: (0, 0)),             # cSE conv1 b
                    pl.BlockSpec((C, Cr), lambda b: (0, 0)),             # cSE conv2 w
                    pl.BlockSpec((C, 1), lambda b: (0, 0)),              # cSE conv2 b
                    pl.BlockSpec((1, C), lambda b: (0, 0)),              # sSE weight row
                    pl.BlockSpec(memory_space=pltpu.MemorySpace.SMEM),   # sSE scalar bias
                ],
                out_specs=pl.BlockSpec((None, C, HWp), lambda b: (b, 0, 0)),
            ),
            compiler_params=pltpu.CompilerParams(
                dimension_semantics=("parallel",),
                vmem_limit_bytes=vmem_limit),
        )(x_p, w1t, b1, w2t, b2, ws_row, bs)
    else:
        # --- cSE gate in plain XLA (fuses with the mean epilogue; no extra Pallas dispatch) ---
        pooled = jnp.mean(x.astype(jnp.float32), axis=2)                        # (B, C)
        h = jax.nn.relu(pooled @ w1t.T.astype(jnp.float32) + b1[:, 0])          # (B, Cr)
        cse = jax.nn.sigmoid(h @ w2t.T.astype(jnp.float32) + b2[:, 0])          # (B, C)
        cse = cse.reshape(B, C, 1)

        T = _pick_spatial_tile(HWp, C, blk_target_f32)
        n_tiles = HWp // T
        if B * n_tiles < 2 and HWp >= 256:             # keep both v7x TCs busy
            t = (HWp // 2) // 128 * 128
            while t >= 128 and HWp % t != 0:
                t -= 128
            if t >= 128:
                T, n_tiles = t, HWp // t

        vmem_limit = int(min(vmem_ceiling, max(8 * 1024 * 1024, 8 * C * T * 4)))
        out = pl.pallas_call(
            _scse_spatial_kernel,
            out_shape=jax.ShapeDtypeStruct((B, C, HWp), x.dtype),
            grid_spec=pltpu.PrefetchScalarGridSpec(
                num_scalar_prefetch=0,
                grid=(B, n_tiles),
                in_specs=[
                    pl.BlockSpec((None, C, T), lambda b, t: (b, 0, t)),   # x tile
                    pl.BlockSpec((None, C, 1), lambda b, t: (b, 0, 0)),   # cSE gate (per batch)
                    pl.BlockSpec((1, C), lambda b, t: (0, 0)),            # sSE weight row
                    pl.BlockSpec(memory_space=pltpu.MemorySpace.SMEM),    # sSE scalar bias
                ],
                out_specs=pl.BlockSpec((None, C, T), lambda b, t: (b, 0, t)),
            ),
            compiler_params=pltpu.CompilerParams(
                dimension_semantics=("parallel", "parallel"),
                vmem_limit_bytes=vmem_limit),
        )(x_p, cse, ws_row, bs)

    if HWp != HW:
        out = out[:, :, :HW]
    return out.reshape(B, C, H, W)


def scse_reference(x, w1t, b1, w2t, b2, ws_row, bs):
    """Pure-JAX reference of SCSEModule.forward, NCHW in / NCHW out."""
    pooled = jnp.mean(x, axis=(2, 3))                                    # (B, C)
    h = jax.nn.relu(pooled @ w1t.T + b1[:, 0])                           # (B, Cr)
    cse = jax.nn.sigmoid(h @ w2t.T + b2[:, 0])[:, :, None, None]         # (B, C, 1, 1)
    sse = jax.nn.sigmoid(
        jnp.einsum('bchw,c->bhw', x, ws_row[0]) + bs[0, 0])[:, None]     # (B, 1, H, W)
    return x * cse + x * sse


if __name__ == "__main__":
    # Attention(name='scse', in_channels=32, reduction=16)
    B, C, H, W = 2, 32, 16, 16
    reduction = 16
    Cr = max(1, C // reduction)

    key = jax.random.PRNGKey(0)
    k_x, k_w1, k_b1, k_w2, k_b2, k_ws, k_bs, k_x2 = jax.random.split(key, 8)

    x = jax.random.normal(k_x, (B, C, H, W), dtype=jnp.float32)

    # Conv-1x1 parameters in PyTorch-native (out, in) layout.
    w1t = jax.random.normal(k_w1, (Cr, C), dtype=jnp.float32) * 0.1     # cSE conv1 weight
    b1 = jax.random.normal(k_b1, (Cr, 1), dtype=jnp.float32) * 0.1
    w2t = jax.random.normal(k_w2, (C, Cr), dtype=jnp.float32) * 0.1     # cSE conv2 weight
    b2 = jax.random.normal(k_b2, (C, 1), dtype=jnp.float32) * 0.1
    ws_row = jax.random.normal(k_ws, (1, C), dtype=jnp.float32) * 0.1   # sSE conv weight
    bs = jax.random.normal(k_bs, (1, 1), dtype=jnp.float32) * 0.1

    # --- fused single-pass path (default for small slabs) ---
    ref = scse_reference(x, w1t, b1, w2t, b2, ws_row, bs)
    out = jax.block_until_ready(scse_attention(x, w1t, b1, w2t, b2, ws_row, bs))
    assert out.shape == (B, C, H, W)
    assert jnp.allclose(out, ref, atol=1e-5, rtol=1e-5), "fused path mismatch vs reference"

    # --- tiled fallback path + HW padding (HW not a multiple of 128) ---
    x2 = jax.random.normal(k_x2, (1, C, 10, 10), dtype=jnp.float32)
    ref2 = scse_reference(x2, w1t, b1, w2t, b2, ws_row, bs)
    out2 = jax.block_until_ready(
        scse_attention(x2, w1t, b1, w2t, b2, ws_row, bs, force_fused=False))
    assert jnp.allclose(out2, ref2, atol=1e-5, rtol=1e-5), "tiled path mismatch vs reference"

    print("KERNEL_OK")
</pallas_src>

<mosaic_0001>
module attributes {stable_mosaic.version = 11 : i64} {
  func.func @_scse_fused_kernel(%arg0: i32, %arg1: memref<1x32x256xf32, #tpu.memory_space<vmem>>, %arg2: memref<2x32xf32, #tpu.memory_space<vmem>>, %arg3: memref<2x1xf32, #tpu.memory_space<vmem>>, %arg4: memref<32x2xf32, #tpu.memory_space<vmem>>, %arg5: memref<32x1xf32, #tpu.memory_space<vmem>>, %arg6: memref<1x32xf32, #tpu.memory_space<vmem>>, %arg7: memref<1x1xf32, #tpu.memory_space<smem>>, %arg8: memref<1x32x256xf32, #tpu.memory_space<vmem>>) attributes {dimension_semantics = [#tpu.dimension_semantics<parallel>], iteration_bounds = array<i64: 2>, scalar_prefetch = 0 : i64, scratch_operands = 0 : i64, tpu.core_type = #tpu.core_type<tc>, window_params = [{transform_indices = @transform_0, window_bounds = array<i64: 1, 32, 256>}, {pipeline_mode = #tpu.pipeline_mode<synchronous>, transform_indices = @transform_1, window_bounds = array<i64: 2, 32>}, {pipeline_mode = #tpu.pipeline_mode<synchronous>, transform_indices = @transform_2, window_bounds = array<i64: 2, 1>}, {pipeline_mode = #tpu.pipeline_mode<synchronous>, transform_indices = @transform_3, window_bounds = array<i64: 32, 2>}, {pipeline_mode = #tpu.pipeline_mode<synchronous>, transform_indices = @transform_4, window_bounds = array<i64: 32, 1>}, {pipeline_mode = #tpu.pipeline_mode<synchronous>, transform_indices = @transform_5, window_bounds = array<i64: 1, 32>}, {transform_indices = @transform_6, window_bounds = array<i64: 1, 1>}, {transform_indices = @transform_7, window_bounds = array<i64: 1, 32, 256>}]} {
    %c0 = arith.constant 0 : index
    %c0_0 = arith.constant 0 : index
    %c0_1 = arith.constant 0 : index
    %0 = vector.load %arg1[%c0, %c0_0, %c0_1] : memref<1x32x256xf32, #tpu.memory_space<vmem>>, vector<1x32x256xf32>
    %1 = vector.shape_cast %0 : vector<1x32x256xf32> to vector<32x256xf32>
    %cst = arith.constant dense<0.000000e+00> : vector<32xf32>
    %2 = vector.multi_reduction <add>, %1, %cst [1] : vector<32x256xf32> to vector<32xf32>
    %3 = vector.shape_cast %2 : vector<32xf32> to vector<32x1xf32>
    %cst_2 = arith.constant 3.906250e-03 : f32
    %4 = vector.broadcast %cst_2 : f32 to vector<32x1xf32>
    %5 = arith.mulf %3, %4 : vector<32x1xf32>
    %c0_3 = arith.constant 0 : index
    %c0_4 = arith.constant 0 : index
    %6 = vector.load %arg2[%c0_3, %c0_4] : memref<2x32xf32, #tpu.memory_space<vmem>>, vector<2x32xf32>
    %cst_5 = arith.constant dense<0.000000e+00> : vector<2x1xf32>
    %7 = tpu.matmul %6, %5, %cst_5 {dimension_numbers = #tpu.dot_dimension_numbers<[1], [0], [0], [1], [0, 0, 1, 1], [], []>} : vector<2x32xf32>, vector<32x1xf32>, vector<2x1xf32> -> vector<2x1xf32>
    %c0_6 = arith.constant 0 : index
    %c0_7 = arith.constant 0 : index
    %8 = vector.load %arg3[%c0_6, %c0_7] : memref<2x1xf32, #tpu.memory_space<vmem>>, vector<2x1xf32>
    %9 = arith.addf %7, %8 : vector<2x1xf32>
    %cst_8 = arith.constant 0.000000e+00 : f32
    %10 = vector.broadcast %cst_8 : f32 to vector<2x1xf32>
    %11 = arith.maximumf %9, %10 : vector<2x1xf32>
    %c0_9 = arith.constant 0 : index
    %c0_10 = arith.constant 0 : index
    %12 = vector.load %arg4[%c0_9, %c0_10] : memref<32x2xf32, #tpu.memory_space<vmem>>, vector<32x2xf32>
    %cst_11 = arith.constant dense<0.000000e+00> : vector<32x1xf32>
    %13 = tpu.matmul %12, %11, %cst_11 {dimension_numbers = #tpu.dot_dimension_numbers<[1], [0], [0], [1], [0, 0, 1, 1], [], []>} : vector<32x2xf32>, vector<2x1xf32>, vector<32x1xf32> -> vector<32x1xf32>
    %c0_12 = arith.constant 0 : index
    %c0_13 = arith.constant 0 : index
    %14 = vector.load %arg5[%c0_12, %c0_13] : memref<32x1xf32, #tpu.memory_space<vmem>>, vector<32x1xf32>
    %15 = arith.addf %13, %14 : vector<32x1xf32>
    %16 = arith.negf %15 : vector<32x1xf32>
    %17 = math.exp %16 : vector<32x1xf32>
    %cst_14 = arith.constant 1.000000e+00 : f32
    %18 = vector.broadcast %cst_14 : f32 to vector<32x1xf32>
    %19 = arith.addf %18, %17 : vector<32x1xf32>
    %20 = arith.divf %18, %19 : vector<32x1xf32>
    %c0_15 = arith.constant 0 : index
    %c0_16 = arith.constant 0 : index
    %21 = vector.load %arg6[%c0_15, %c0_16] : memref<1x32xf32, #tpu.memory_space<vmem>>, vector<1x32xf32>
    %cst_17 = arith.constant dense<0.000000e+00> : vector<1x256xf32>
    %22 = tpu.matmul %21, %1, %cst_17 {dimension_numbers = #tpu.dot_dimension_numbers<[1], [0], [0], [1], [0, 0, 1, 1], [], []>} : vector<1x32xf32>, vector<32x256xf32>, vector<1x256xf32> -> vector<1x256xf32>
    %c0_18 = arith.constant 0 : index
    %c0_19 = arith.constant 0 : index
    %23 = memref.load %arg7[%c0_18, %c0_19] : memref<1x1xf32, #tpu.memory_space<smem>>
    %24 = vector.broadcast %23 : f32 to vector<1x256xf32>
    %25 = arith.addf %22, %24 : vector<1x256xf32>
    %26 = arith.negf %25 : vector<1x256xf32>
    %27 = math.exp %26 : vector<1x256xf32>
    %cst_20 = arith.constant 1.000000e+00 : f32
    %28 = vector.broadcast %cst_20 : f32 to vector<1x256xf32>
    %29 = arith.addf %28, %27 : vector<1x256xf32>
    %30 = arith.divf %28, %29 : vector<1x256xf32>
    %31 = vector.broadcast %20 : vector<32x1xf32> to vector<32x256xf32>
    %32 = vector.broadcast %30 : vector<1x256xf32> to vector<32x256xf32>
    %33 = arith.addf %31, %32 : vector<32x256xf32>
    %34 = arith.mulf %1, %33 : vector<32x256xf32>
    %c0_21 = arith.constant 0 : index
    %c0_22 = arith.constant 0 : index
    %c0_23 = arith.constant 0 : index
    %35 = vector.load %arg8[%c0_21, %c0_22, %c0_23] : memref<1x32x256xf32, #tpu.memory_space<vmem>>, vector<1x32x256xf32>
    %36 = vector.shape_cast %35 : vector<1x32x256xf32> to vector<32x256xf32>
    %37 = vector.shape_cast %34 : vector<32x256xf32> to vector<1x32x256xf32>
    tpu.vector_store %arg8[%c0_21, %c0_22, %c0_23], %37 {strides = array<i32>} : memref<1x32x256xf32, #tpu.memory_space<vmem>>, vector<1x32x256xf32>,
    return
  }
  func.func @transform_0(%arg0: i32) -> (i32, i32, i32) {
    %c0_i32 = arith.constant 0 : i32
    %c0_i32_0 = arith.constant 0 : i32
    %c0_i32_1 = arith.constant 0 : i32
    return %arg0, %c0_i32, %c0_i32_0 : i32, i32, i32
  }
  func.func @transform_1(%arg0: i32) -> (i32, i32) {
    %c0_i32 = arith.constant 0 : i32
    %c0_i32_0 = arith.constant 0 : i32
    %c0_i32_1 = arith.constant 0 : i32
    return %c0_i32, %c0_i32_0 : i32, i32
  }
  func.func @transform_2(%arg0: i32) -> (i32, i32) {
    %c0_i32 = arith.constant 0 : i32
    %c0_i32_0 = arith.constant 0 : i32
    %c0_i32_1 = arith.constant 0 : i32
    return %c0_i32, %c0_i32_0 : i32, i32
  }
  func.func @transform_3(%arg0: i32) -> (i32, i32) {
    %c0_i32 = arith.constant 0 : i32
    %c0_i32_0 = arith.constant 0 : i32
    %c0_i32_1 = arith.constant 0 : i32
    return %c0_i32, %c0_i32_0 : i32, i32
  }
  func.func @transform_4(%arg0: i32) -> (i32, i32) {
    %c0_i32 = arith.constant 0 : i32
    %c0_i32_0 = arith.constant 0 : i32
    %c0_i32_1 = arith.constant 0 : i32
    return %c0_i32, %c0_i32_0 : i32, i32
  }
  func.func @transform_5(%arg0: i32) -> (i32, i32) {
    %c0_i32 = arith.constant 0 : i32
    %c0_i32_0 = arith.constant 0 : i32
    %c0_i32_1 = arith.constant 0 : i32
    return %c0_i32, %c0_i32_0 : i32, i32
  }
  func.func @transform_6(%arg0: i32) -> (i32, i32) {
    %c0_i32 = arith.constant 0 : i32
    %c0_i32_0 = arith.constant 0 : i32
    %c0_i32_1 = arith.constant 0 : i32
    return %c0_i32, %c0_i32_0 : i32, i32
  }
  func.func @transform_7(%arg0: i32) -> (i32, i32, i32) {
    %c0_i32 = arith.constant 0 : i32
    %c0_i32_0 = arith.constant 0 : i32
    %c0_i32_1 = arith.constant 0 : i32
    return %arg0, %c0_i32, %c0_i32_0 : i32, i32, i32
  }
}

</mosaic_0001>

<llo_original>
// kernel: tpu_custom_call.1
$region0: #{tpu_custom_call.1}
  #allocation0 [shape = 'u32[]', space=smem, size = 0x4, offset = 0x4, fixed_abs, tag = 'smem constant byte address 0x4 - core index']
  #allocation1 [shape = 'u32[144,128]{1,0:T(1,128)}', space=vmem, size = 0x12000, scoped, tag = 'internal scratch']
  #allocation2 [shape = 'f32[1,1]{1,0:T(1,128)S(6)}', space=smem, size = 0x200, scoped, tag = 'scoped memory for tpu_custom_call.1']
  %s0 = inlined_call_operand.hbm [shape: f32[2,32,256], index: 0, kind: input, shape index: {}]
  %s1 = inlined_call_operand.vmem [shape: f32[2,32], index: 1, kind: input, shape index: {}]
  %s2 = inlined_call_operand.vmem [shape: f32[2,1], index: 2, kind: input, shape index: {}]
  %s3 = inlined_call_operand.vmem [shape: f32[32,2], index: 3, kind: input, shape index: {}]
  %s4 = inlined_call_operand.vmem [shape: f32[32,1], index: 4, kind: input, shape index: {}]
  %s5 = inlined_call_operand.vmem [shape: f32[1,32], index: 5, kind: input, shape index: {}]
  %s6 = inlined_call_operand.<no memory space> [shape: f32[1,1], index: 6, kind: input, shape index: {}]
  %s7 = inlined_call_operand.hbm [shape: f32[2,32,256], index: 7, kind: output, shape index: {}]
  %s8 = sld [smem:[#allocation0]]
  $region65: #{tpu_custom_call.1} parent=0
    _
  %s10 = ssub.s32 1, %s8
  %s11 = scalar_select 0, %s10, %s8
  %12 = sst [smem:[#allocation2]] %s6
  $region1: #{tpu_custom_call.1} parent=0
    #allocation3 [shape = 'u8[65536]{0}', space=vmem, size = 0x10000, scoped, tag = 'input window, operand 0']
    #allocation4 [shape = 's32[2]{0}', space=sflag, size = 0x8, scoped, tag = 'scoped memory for tpu_custom_call.1']
    #allocation5 [shape = 's32[2]{0}', space=sflag, size = 0x8, scoped, tag = 'scoped memory for tpu_custom_call.1']
    #allocation6 [shape = 'u8[65536]{0}', space=vmem, size = 0x10000, scoped, tag = 'output window, operand 0']
    %13 = vsyncpa [#allocation4], 0
    %s14 = scalar_lea.sflag [#allocation4], 1
    %15 = vsyncpa %s14, 0
    %16 = vsyncpa [#allocation5], 0
    %s17 = scalar_lea.sflag [#allocation5], 1
    %18 = vsyncpa %s17, 0
    loop: start=0, step=1, limit=4
    $region2: #{tpu_custom_call.1} parent=1 // loop_pre_header
      _
    $region3: #{tpu_custom_call.1} parent=1 // loop_header
      %s20 = sphi 0, %s24
      %p21 = scmp.ge.s32.totalorder %s20, 4
      %s30 = sphi 0, %s32
      %s33 = sphi 0, %s30
      %s34 = sphi 0, %s33
      %s50 = sphi 0, %s34
      %s54 = sphi 0, %s54
      %s56 = sphi 0, %s54
      %s57 = sphi 0, %s56
      %s71 = sphi 0, %s57
      %s75 = sphi 0, %s75
      %s77 = sphi 0, %s75
      %s78 = sphi 0, %s77
      %s92 = sphi 0, %s78
      %s96 = sphi 0, %s96
      %s98 = sphi 0, %s96
      %s99 = sphi 0, %s98
      %s113 = sphi 0, %s99
      %s117 = sphi 0, %s117
      %s119 = sphi 0, %s117
      %s120 = sphi 0, %s119
      %s134 = sphi 0, %s120
      %s138 = sphi 0, %s138
      %s140 = sphi 0, %s138
      %s141 = sphi 0, %s140
      %s155 = sphi 0, %s141
      %s159 = sphi 0, %s159
      %s161 = sphi 0, %s159
      %s162 = sphi 0, %s161
      %s176 = sphi 0, %s162
      %s182 = sphi 0, %s184
      %s185 = sphi 0, %s182
      %s186 = sphi 0, %s185
      %s202 = sphi 0, %s186
    $region4: #{tpu_custom_call.1} parent=1 // loop_header_branch
      %23 = sbr.rel (%p21) target = $region8
    $region5: #{tpu_custom_call.1} parent=1 // loop_body
      %s25 = ssub.s32 %s20, 1
      %s26 = ssub.s32 %s20, 2
      %s27 = sadd.s32 %s20, 1
      %s28 = ssub.s32 %s20, %s27
      %p29 = scmp.eq.s32.totalorder %s28, 0
      %s31 = sadd.s32 %s30, 1
      %s32 = scalar_select %p29, %s30, %s31
      %p35 = pneg %p29
      %p36 = scmp.eq.s32.totalorder %s20, 1
      %p37 = por %p35, %p36
      %p38 = scmp.ne.s32.totalorder %s30, %s33
      %p39 = scmp.eq.s32.totalorder %s20, 0
      %p40 = por %p38, %p39
      %p41 = scmp.ne.s32.totalorder %s30, %s33
      %p42 = scmp.eq.s32.totalorder %s25, 1
      %p43 = por %p41, %p42
      %p44 = scmp.ne.s32.totalorder %s33, %s34
      %p45 = scmp.eq.s32.totalorder %s25, 0
      %p46 = por %p44, %p45
      %p47 = scmp.ne.s32.totalorder %s33, %s34
      %p48 = scmp.eq.s32.totalorder %s26, 1
      %p49 = por %p47, %p48
      %p51 = scmp.ne.s32.totalorder %s34, %s50
      %p52 = scmp.eq.s32.totalorder %s26, 0
      %p53 = por %p51, %p52
      %s55 = sadd.s32 %s54, 1
      %p58 = scmp.eq.s32.totalorder %s20, 1
      %p59 = scmp.ne.s32.totalorder %s54, %s56
      %p60 = scmp.eq.s32.totalorder %s20, 0
      %p61 = por %p59, %p60
      %p62 = scmp.ne.s32.totalorder %s54, %s56
      %p63 = scmp.eq.s32.totalorder %s25, 1
      %p64 = por %p62, %p63
      %p65 = scmp.ne.s32.totalorder %s56, %s57
      %p66 = scmp.eq.s32.totalorder %s25, 0
      %p67 = por %p65, %p66
      %p68 = scmp.ne.s32.totalorder %s56, %s57
      %p69 = scmp.eq.s32.totalorder %s26, 1
      %p70 = por %p68, %p69
      %p72 = scmp.ne.s32.totalorder %s57, %s71
      %p73 = scmp.eq.s32.totalorder %s26, 0
      %p74 = por %p72, %p73
      %s76 = sadd.s32 %s75, 1
      %p79 = scmp.eq.s32.totalorder %s20, 1
      %p80 = scmp.ne.s32.totalorder %s75, %s77
      %p81 = scmp.eq.s32.totalorder %s20, 0
      %p82 = por %p80, %p81
      %p83 = scmp.ne.s32.totalorder %s75, %s77
      %p84 = scmp.eq.s32.totalorder %s25, 1
      %p85 = por %p83, %p84
      %p86 = scmp.ne.s32.totalorder %s77, %s78
      %p87 = scmp.eq.s32.totalorder %s25, 0
      %p88 = por %p86, %p87
      %p89 = scmp.ne.s32.totalorder %s77, %s78
      %p90 = scmp.eq.s32.totalorder %s26, 1
      %p91 = por %p89, %p90
      %p93 = scmp.ne.s32.totalorder %s78, %s92
      %p94 = scmp.eq.s32.totalorder %s26, 0
      %p95 = por %p93, %p94
      %s97 = sadd.s32 %s96, 1
      %p100 = scmp.eq.s32.totalorder %s20, 1
      %p101 = scmp.ne.s32.totalorder %s96, %s98
      %p102 = scmp.eq.s32.totalorder %s20, 0
      %p103 = por %p101, %p102
      %p104 = scmp.ne.s32.totalorder %s96, %s98
      %p105 = scmp.eq.s32.totalorder %s25, 1
      %p106 = por %p104, %p105
      %p107 = scmp.ne.s32.totalorder %s98, %s99
      %p108 = scmp.eq.s32.totalorder %s25, 0
      %p109 = por %p107, %p108
      %p110 = scmp.ne.s32.totalorder %s98, %s99
      %p111 = scmp.eq.s32.totalorder %s26, 1
      %p112 = por %p110, %p111
      %p114 = scmp.ne.s32.totalorder %s99, %s113
      %p115 = scmp.eq.s32.totalorder %s26, 0
      %p116 = por %p114, %p115
      %s118 = sadd.s32 %s117, 1
      %p121 = scmp.eq.s32.totalorder %s20, 1
      %p122 = scmp.ne.s32.totalorder %s117, %s119
      %p123 = scmp.eq.s32.totalorder %s20, 0
      %p124 = por %p122, %p123
      %p125 = scmp.ne.s32.totalorder %s117, %s119
      %p126 = scmp.eq.s32.totalorder %s25, 1
      %p127 = por %p125, %p126
      %p128 = scmp.ne.s32.totalorder %s119, %s120
      %p129 = scmp.eq.s32.totalorder %s25, 0
      %p130 = por %p128, %p129
      %p131 = scmp.ne.s32.totalorder %s119, %s120
      %p132 = scmp.eq.s32.totalorder %s26, 1
      %p133 = por %p131, %p132
      %p135 = scmp.ne.s32.totalorder %s120, %s134
      %p136 = scmp.eq.s32.totalorder %s26, 0
      %p137 = por %p135, %p136
      %s139 = sadd.s32 %s138, 1
      %p142 = scmp.eq.s32.totalorder %s20, 1
      %p143 = scmp.ne.s32.totalorder %s138, %s140
      %p144 = scmp.eq.s32.totalorder %s20, 0
      %p145 = por %p143, %p144
      %p146 = scmp.ne.s32.totalorder %s138, %s140
      %p147 = scmp.eq.s32.totalorder %s25, 1
      %p148 = por %p146, %p147
      %p149 = scmp.ne.s32.totalorder %s140, %s141
      %p150 = scmp.eq.s32.totalorder %s25, 0
      %p151 = por %p149, %p150
      %p152 = scmp.ne.s32.totalorder %s140, %s141
      %p153 = scmp.eq.s32.totalorder %s26, 1
      %p154 = por %p152, %p153
      %p156 = scmp.ne.s32.totalorder %s141, %s155
      %p157 = scmp.eq.s32.totalorder %s26, 0
      %p158 = por %p156, %p157
      %s160 = sadd.s32 %s159, 1
      %p163 = scmp.eq.s32.totalorder %s20, 1
      %p164 = scmp.ne.s32.totalorder %s159, %s161
      %p165 = scmp.eq.s32.totalorder %s20, 0
      %p166 = por %p164, %p165
      %p167 = scmp.ne.s32.totalorder %s159, %s161
      %p168 = scmp.eq.s32.totalorder %s25, 1
      %p169 = por %p167, %p168
      %p170 = scmp.ne.s32.totalorder %s161, %s162
      %p171 = scmp.eq.s32.totalorder %s25, 0
      %p172 = por %p170, %p171
      %p173 = scmp.ne.s32.totalorder %s161, %s162
      %p174 = scmp.eq.s32.totalorder %s26, 1
      %p175 = por %p173, %p174
      %p177 = scmp.ne.s32.totalorder %s162, %s176
      %p178 = scmp.eq.s32.totalorder %s26, 0
      %p179 = por %p177, %p178
      %s180 = ssub.s32 %s20, %s27
      %p181 = scmp.eq.s32.totalorder %s180, 0
      %s183 = sadd.s32 %s182, 1
      %s184 = scalar_select %p181, %s182, %s183
      %p187 = pneg %p181
      %p188 = scmp.eq.s32.totalorder %s20, 1
      %p189 = por %p187, %p188
      %p190 = scmp.ne.s32.totalorder %s182, %s185
      %p191 = scmp.eq.s32.totalorder %s20, 0
      %p192 = por %p190, %p191
      %p193 = scmp.ne.s32.totalorder %s182, %s185
      %p194 = scmp.eq.s32.totalorder %s25, 1
      %p195 = por %p193, %p194
      %p196 = scmp.ne.s32.totalorder %s185, %s186
      %p197 = scmp.eq.s32.totalorder %s25, 0
      %p198 = por %p196, %p197
      %p199 = scmp.ne.s32.totalorder %s185, %s186
      %p200 = scmp.eq.s32.totalorder %s26, 1
      %p201 = por %p199, %p200
      %p203 = scmp.ne.s32.totalorder %s186, %s202
      %p204 = scmp.eq.s32.totalorder %s26, 0
      %p205 = por %p203, %p204
      %p206 = scmp.le.s32.totalorder 1, %s20
      %p207 = scmp.lt.s32.totalorder %s20, 3
      %p208 = pnand %p206, %p207
      %p209 = pneg %p208
      // Predicated region
      $region9: #{tpu_custom_call.1} parent=5 // pred_check
        _
      $region10: #{tpu_custom_call.1} parent=5 // pred_check_branch
        %211 = sbr.rel (%p208) target = $region12
      $region11: #{tpu_custom_call.1} parent=5 // pred_region
        %s212 = ssub.s32 %s20, 1
        // Predicated region
        $region13: #{tpu_custom_call.1} parent=11 // pred_check
          %p213 = pneg %p67
        $region14: #{tpu_custom_call.1} parent=11 // pred_check_branch
          %215 = sbr.rel (%p213) target = $region16
        $region15: #{tpu_custom_call.1} parent=11 // pred_region
          _
        $region16: #{tpu_custom_call.1} parent=11 // pred_fallthru
          _
        // Predicated region
        $region17: #{tpu_custom_call.1} parent=11 // pred_check
          %p216 = pneg %p88
        $region18: #{tpu_custom_call.1} parent=11 // pred_check_branch
          %218 = sbr.rel (%p216) target = $region20
        $region19: #{tpu_custom_call.1} parent=11 // pred_region
          _
        $region20: #{tpu_custom_call.1} parent=11 // pred_fallthru
          _
        // Predicated region
        $region21: #{tpu_custom_call.1} parent=11 // pred_check
          %p219 = pneg %p109
        $region22: #{tpu_custom_call.1} parent=11 // pred_check_branch
          %221 = sbr.rel (%p219) target = $region24
        $region23: #{tpu_custom_call.1} parent=11 // pred_region
          _
        $region24: #{tpu_custom_call.1} parent=11 // pred_fallthru
          _
        // Predicated region
        $region25: #{tpu_custom_call.1} parent=11 // pred_check
          %p222 = pneg %p130
        $region26: #{tpu_custom_call.1} parent=11 // pred_check_branch
          %224 = sbr.rel (%p222) target = $region28
        $region27: #{tpu_custom_call.1} parent=11 // pred_region
          _
        $region28: #{tpu_custom_call.1} parent=11 // pred_fallthru
          _
        // Predicated region
        $region29: #{tpu_custom_call.1} parent=11 // pred_check
          %p225 = pneg %p151
        $region30: #{tpu_custom_call.1} parent=11 // pred_check_branch
          %227 = sbr.rel (%p225) target = $region32
        $region31: #{tpu_custom_call.1} parent=11 // pred_region
          _
        $region32: #{tpu_custom_call.1} parent=11 // pred_fallthru
          _
        // Predicated region
        $region33: #{tpu_custom_call.1} parent=11 // pred_check
          %p228 = pneg %p172
        $region34: #{tpu_custom_call.1} parent=11 // pred_check_branch
          %230 = sbr.rel (%p228) target = $region36
        $region35: #{tpu_custom_call.1} parent=11 // pred_region
          _
        $region36: #{tpu_custom_call.1} parent=11 // pred_fallthru
          _
      $region12: #{tpu_custom_call.1} parent=5 // pred_fallthru
        _
      %p231 = scmp.lt.s32.totalorder %s20, 2
      // Predicated region
      $region37: #{tpu_custom_call.1} parent=5 // pred_check
        %p232 = pneg %p231
      $region38: #{tpu_custom_call.1} parent=5 // pred_check_branch
        %234 = sbr.rel (%p232) target = $region40
      $region39: #{tpu_custom_call.1} parent=5 // pred_region
        // Predicated region
        $region41: #{tpu_custom_call.1} parent=39 // pred_check
          %p235 = pneg %p40
        $region42: #{tpu_custom_call.1} parent=39 // pred_check_branch
          %237 = sbr.rel (%p235) target = $region44
        $region43: #{tpu_custom_call.1} parent=39 // pred_region
          %s238 = sand.u32 %s30, 1
          %s239 = scalar_lea.sflag [#allocation4], %s238
          %s240 = sand.u32 %s30, 1
          %s241 = smul.addr %s240, 64
          %s242 = scalar_lea.vmem [#allocation3], %s241
          %s244 = ssub.s32 1024, 1024
          %245 = vsyncadd %s239, %s244
          %s246 = smul.addr %s20, 8
          %s247 = smul.addr %s246, 128
          %s248 = scalar_lea.hbm %s0, %s247
          %s249 = sshll.u32 %s242, 4
          %s250 = int_to_ptr.vmem [resolvable:$true] %s249
          %255 = dma.hbm_to_vmem [thread:$0]  %s248, 1024, %s250, %s239, 256, 256, 16
        $region44: #{tpu_custom_call.1} parent=39 // pred_fallthru
          _
      $region40: #{tpu_custom_call.1} parent=5 // pred_fallthru
        _
      %p256 = scmp.le.s32.totalorder 1, %s20
      %p257 = scmp.lt.s32.totalorder %s20, 3
      %p258 = pnand %p256, %p257
      %p259 = pneg %p258
      // Predicated region
      $region45: #{tpu_custom_call.1} parent=5 // pred_check
        _
      $region46: #{tpu_custom_call.1} parent=5 // pred_check_branch
        %261 = sbr.rel (%p258) target = $region48
      $region47: #{tpu_custom_call.1} parent=5 // pred_region
        %s262 = ssub.s32 %s20, 1
        %s263 = sand.u32 %s33, 1
        %s264 = scalar_lea.sflag [#allocation4], %s263
        %s265 = sand.u32 %s33, 1
        %s266 = smul.addr %s265, 64
        %s267 = scalar_lea.vmem [#allocation3], %s266
        // Predicated region
        $region49: #{tpu_custom_call.1} parent=47 // pred_check
          %p268 = pneg %p46
        $region50: #{tpu_custom_call.1} parent=47 // pred_check_branch
          %270 = sbr.rel (%p268) target = $region52
        $region51: #{tpu_custom_call.1} parent=47 // pred_region
          %271 = dma.done %s264, 1024
        $region52: #{tpu_custom_call.1} parent=47 // pred_fallthru
          _
        %s272 = sand.u32 %s33, 1
        %s273 = scalar_lea.sflag [#allocation4], %s272
        %s274 = sand.u32 %s33, 1
        %s275 = smul.addr %s274, 64
        %s276 = scalar_lea.vmem [#allocation3], %s275
        %p277 = pneg %p46
        %p278 = pneg %p43
        %p279 = pneg %p67
        %p280 = pneg %p64
        %p281 = pneg %p88
        %p282 = pneg %p85
        %p283 = pneg %p109
        %p284 = pneg %p106
        %p285 = pneg %p130
        %p286 = pneg %p127
        %p287 = pneg %p151
        %p288 = pneg %p148
        %p289 = pneg %p172
        %p290 = pneg %p169
        %p291 = pneg %p198
        %p292 = pneg %p195
        %s293 = sand.u32 %s185, 1
        %s294 = scalar_lea.sflag [#allocation5], %s293
        %s295 = sand.u32 %s185, 1
        %s296 = smul.addr %s295, 64
        %s297 = scalar_lea.vmem [#allocation6], %s296
        %v298 = vld [vmem:[%s267] sm:$0xff]
        %v299 = vld [vmem:[%s267 + $0x8] sm:$0xff]
        %v300 = vld [vmem:[%s267 + $0x10] sm:$0xff]
        %v301 = vld [vmem:[%s267 + $0x18] sm:$0xff]
        %v302 = vld [vmem:[%s267 + $0x20] sm:$0xff]
        %v303 = vld [vmem:[%s267 + $0x28] sm:$0xff]
        %v304 = vld [vmem:[%s267 + $0x30] sm:$0xff]
        %v305 = vld [vmem:[%s267 + $0x38] sm:$0xff]
        %v306 = vadd.f32 %v298, %v299
        %307 = vadd.xlane.f32.xlu0 %v306
        %v308 = vpop.xlane.xlu0 %307
        %v309 = vadd.f32 %v300, %v301
        %310 = vadd.xlane.f32.xlu0 %v309
        %v311 = vpop.xlane.xlu0 %310
        %v312 = vadd.f32 %v302, %v303
        %313 = vadd.xlane.f32.xlu0 %v312
        %v314 = vpop.xlane.xlu0 %313
        %v315 = vadd.f32 %v304, %v305
        %316 = vadd.xlane.f32.xlu0 %v315
        %v317 = vpop.xlane.xlu0 %316
        %v318 = vmul.f32 %v308, 0.00390625
        %v319 = vmul.f32 %v311, 0.00390625
        %v320 = vmul.f32 %v314, 0.00390625
        %v321 = vmul.f32 %v317, 0.00390625
        %v322 = vld [vmem:[%s1] sm:$0x3]
        %v323 = vld [vmem:[%s2] sm:$0x3]
        %vm324 = vcmask 261120
        %v326 = vsel %vm324, %v322, 0
        %328 = vmatprep.subr.mxu0 0.0
        %329 = vmatpush1.msra.mxu0 %v318
        %330 = vmatprep.subr.mxu0 0.0
        %331 = vmatpush1.msra.mxu0 %v319
        %332 = vmatprep.subr.mxu0 0.0
        %333 = vmatpush1.msra.mxu0 %v320
        %334 = vmatprep.subr.mxu0 0.0
        %335 = vmatpush1.msra.mxu0 %v321
        %336 = vmatprep.subr.mxu0 0.0
        %337 = vmatpush1.msra.mxu0 0.0
        %338 = vmatprep.subr.mxu0 0.0
        %339 = vmatpush1.msra.mxu0 0.0
        %340 = vmatprep.subr.mxu0 0.0
        %341 = vmatpush1.msra.mxu0 0.0
        %342 = vmatprep.subr.mxu0 0.0
        %343 = vmatpush1.msra.mxu0 0.0
        %344 = vmatprep.subr.mxu0 0.0
        %345 = vmatpush1.msra.mxu0 0.0
        %346 = vmatprep.subr.mxu0 0.0
        %347 = vmatpush1.msra.mxu0 0.0
        %348 = vmatprep.subr.mxu0 0.0
        %349 = vmatpush1.msra.mxu0 0.0
        %350 = vmatprep.subr.mxu0 0.0
        %351 = vmatpush1.msra.mxu0 0.0
        %352 = vmatprep.subr.mxu0 0.0
        %353 = vmatpush1.msra.mxu0 0.0
        %354 = vmatprep.subr.mxu0 0.0
        %355 = vmatpush1.msra.mxu0 0.0
        %356 = vmatprep.subr.mxu0 0.0
        %357 = vmatpush1.msra.mxu0 0.0
        %358 = vmatprep.subr.mxu0 0.0
        %359 = vmatpush1.msra.mxu0 0.0
        %360 = vmatprep.subr.mxu0 0.0
        %361 = vmatpush1.msra.mxu0 0.0
        %362 = vmatprep.subr.mxu0 0.0
        %363 = vmatpush1.msra.mxu0 0.0
        %364 = vmatprep.subr.mxu0 0.0
        %365 = vmatpush1.msra.mxu0 0.0
        %366 = vmatprep.subr.mxu0 0.0
        %367 = vmatpush1.msra.mxu0 0.0
        %368 = vmatprep.subr.mxu0 0.0
        %369 = vmatpush1.msra.mxu0 0.0
        %370 = vmatprep.subr.mxu0 0.0
        %371 = vmatpush1.msra.mxu0 0.0
        %372 = vmatprep.subr.mxu0 0.0
        %373 = vmatpush1.msra.mxu0 0.0
        %374 = vmatprep.subr.mxu0 0.0
        %375 = vmatpush1.msra.mxu0 0.0
        %376 = vmatprep.subr.mxu0 0.0
        %377 = vmatpush1.msra.mxu0 0.0
        %378 = vmatprep.subr.mxu0 0.0
        %379 = vmatpush1.msra.mxu0 0.0
        %380 = vmatprep.subr.mxu0 0.0
        %381 = vmatpush1.msra.mxu0 0.0
        %382 = vmatprep.subr.mxu0 0.0
        %383 = vmatpush1.msra.mxu0 0.0
        %384 = vmatprep.subr.mxu0 0.0
        %385 = vmatpush1.msra.mxu0 0.0
        %386 = vmatprep.subr.mxu0 0.0
        %387 = vmatpush1.msra.mxu0 0.0
        %388 = vmatprep.subr.mxu0 0.0
        %389 = vmatpush1.msra.mxu0 0.0
        %390 = vmatprep.subr.mxu0 0.0
        %391 = vmatpush1.msra.mxu0 0.0
        %392 = vmatprep.mubr.f32.mxu0 0.0
        %393 = vmatmul.mubr.f32.gmra.mrb[0].mxu0 %v326
        %v394 = vpop.f32.mrb[0].mxu0
        %v395 = vadd.f32 %v323, %v394
        %v396 = vpop.f32.mrb[0].mxu0
        %397 = vdwg.mxu0
        %v398 = vmax.f32 %v395, 0.0
        %v399 = vld [vmem:[%s3] sm:$0xff]
        %v400 = vld [vmem:[%s3 + $0x8] sm:$0xff]
        %v401 = vld [vmem:[%s3 + $0x10] sm:$0xff]
        %v402 = vld [vmem:[%s3 + $0x18] sm:$0xff]
        %v403 = vld [vmem:[%s4] sm:$0xff]
        %v404 = vld [vmem:[%s4 + $0x8] sm:$0xff]
        %v405 = vld [vmem:[%s4 + $0x10] sm:$0xff]
        %v406 = vld [vmem:[%s4 + $0x18] sm:$0xff]
        %vm407 = vcmask 15360
        %v409 = vsel %vm407, %v399, 0
        %v412 = vsel %vm407, %v400, 0
        %v415 = vsel %vm407, %v401, 0
        %v418 = vsel %vm407, %v402, 0
        %vm420 = vcmask 1041408
        %v422 = vsel %vm420, %v398, 0
        %424 = vmatprep.subr.mxu0 0.0
        %425 = vmatpush1.msra.mxu0 %v422
        %426 = vmatprep.subr.mxu0 0.0
        %427 = vmatpush1.msra.mxu0 0.0
        %428 = vmatprep.subr.mxu0 0.0
        %429 = vmatpush1.msra.mxu0 0.0
        %430 = vmatprep.subr.mxu0 0.0
        %431 = vmatpush1.msra.mxu0 0.0
        %432 = vmatprep.subr.mxu0 0.0
        %433 = vmatpush1.msra.mxu0 0.0
        %434 = vmatprep.subr.mxu0 0.0
        %435 = vmatpush1.msra.mxu0 0.0
        %436 = vmatprep.subr.mxu0 0.0
        %437 = vmatpush1.msra.mxu0 0.0
        %438 = vmatprep.subr.mxu0 0.0
        %439 = vmatpush1.msra.mxu0 0.0
        %440 = vmatprep.subr.mxu0 0.0
        %441 = vmatpush1.msra.mxu0 0.0
        %442 = vmatprep.subr.mxu0 0.0
        %443 = vmatpush1.msra.mxu0 0.0
        %444 = vmatprep.subr.mxu0 0.0
        %445 = vmatpush1.msra.mxu0 0.0
        %446 = vmatprep.subr.mxu0 0.0
        %447 = vmatpush1.msra.mxu0 0.0
        %448 = vmatprep.subr.mxu0 0.0
        %449 = vmatpush1.msra.mxu0 0.0
        %450 = vmatprep.subr.mxu0 0.0
        %451 = vmatpush1.msra.mxu0 0.0
        %452 = vmatprep.subr.mxu0 0.0
        %453 = vmatpush1.msra.mxu0 0.0
        %454 = vmatprep.subr.mxu0 0.0
        %455 = vmatpush1.msra.mxu0 0.0
        %456 = vmatprep.subr.mxu0 0.0
        %457 = vmatpush1.msra.mxu0 0.0
        %458 = vmatprep.subr.mxu0 0.0
        %459 = vmatpush1.msra.mxu0 0.0
        %460 = vmatprep.subr.mxu0 0.0
        %461 = vmatpush1.msra.mxu0 0.0
        %462 = vmatprep.subr.mxu0 0.0
        %463 = vmatpush1.msra.mxu0 0.0
        %464 = vmatprep.subr.mxu0 0.0
        %465 = vmatpush1.msra.mxu0 0.0
        %466 = vmatprep.subr.mxu0 0.0
        %467 = vmatpush1.msra.mxu0 0.0
        %468 = vmatprep.subr.mxu0 0.0
        %469 = vmatpush1.msra.mxu0 0.0
        %470 = vmatprep.subr.mxu0 0.0
        %471 = vmatpush1.msra.mxu0 0.0
        %472 = vmatprep.subr.mxu0 0.0
        %473 = vmatpush1.msra.mxu0 0.0
        %474 = vmatprep.subr.mxu0 0.0
        %475 = vmatpush1.msra.mxu0 0.0
        %476 = vmatprep.subr.mxu0 0.0
        %477 = vmatpush1.msra.mxu0 0.0
        %478 = vmatprep.subr.mxu0 0.0
        %479 = vmatpush1.msra.mxu0 0.0
        %480 = vmatprep.subr.mxu0 0.0
        %481 = vmatpush1.msra.mxu0 0.0
        %482 = vmatprep.subr.mxu0 0.0
        %483 = vmatpush1.msra.mxu0 0.0
        %484 = vmatprep.subr.mxu0 0.0
        %485 = vmatpush1.msra.mxu0 0.0
        %486 = vmatprep.subr.mxu0 0.0
        %487 = vmatpush1.msra.mxu0 0.0
        %488 = vmatprep.mubr.f32.mxu0 0.0
        %489 = vmatmul.mubr.f32.gmra.mrb[0].mxu0 %v409
        %v490 = vpop.f32.mrb[0].mxu0
        %v491 = vadd.f32 %v403, %v490
        %v492 = vpop.f32.mrb[0].mxu0
        %493 = vmatprep.mubr.f32.mxu0 0.0
        %494 = vmatmul.mubr.f32.gmra.mrb[0].mxu0 %v412
        %v495 = vpop.f32.mrb[0].mxu0
        %v496 = vadd.f32 %v404, %v495
        %v497 = vpop.f32.mrb[0].mxu0
        %498 = vmatprep.mubr.f32.mxu0 0.0
        %499 = vmatmul.mubr.f32.gmra.mrb[0].mxu0 %v415
        %v500 = vpop.f32.mrb[0].mxu0
        %v501 = vadd.f32 %v405, %v500
        %v502 = vpop.f32.mrb[0].mxu0
        %503 = vmatprep.mubr.f32.mxu0 0.0
        %504 = vmatmul.mubr.f32.gmra.mrb[0].mxu0 %v418
        %v505 = vpop.f32.mrb[0].mxu0
        %v506 = vadd.f32 %v406, %v505
        %v507 = vpop.f32.mrb[0].mxu0
        %508 = vdwg.mxu0
        %v509 = vxor.u32 %v491, 2147483648
        %v510 = vxor.u32 %v496, 2147483648
        %v511 = vxor.u32 %v501, 2147483648
        %v512 = vxor.u32 %v506, 2147483648
        %v513 = vmul.f32 %v509, 1.442695
        %v514 = vpow.pop %v513
        %v515 = vmul.f32 %v510, 1.442695
        %v516 = vpow.pop %v515
        %v517 = vmul.f32 %v511, 1.442695
        %v518 = vpow.pop %v517
        %v519 = vmul.f32 %v512, 1.442695
        %v520 = vpow.pop %v519
        %v521 = vadd.f32 %v514, 1.0
        %v522 = vadd.f32 %v516, 1.0
        %v523 = vadd.f32 %v518, 1.0
        %v524 = vadd.f32 %v520, 1.0
        %v525 = vrcp.pop %v521
        %v526 = vmul.f32 1.0, %v525
        %v527 = vrcp.pop %v522
        %v528 = vmul.f32 1.0, %v527
        %v529 = vrcp.pop %v523
        %v530 = vmul.f32 1.0, %v529
        %v531 = vrcp.pop %v524
        %v532 = vmul.f32 1.0, %v531
        %v533 = vld [vmem:[%s5] sm:$0x1]
        %s534 = sld [smem:[#allocation2]]
        %v535 = vstv %s534
        %v537 = vsel %vm324, %v533, 0
        %539 = vmatprep.subr.mxu0 %v299
        %540 = vmatpush1.msra.mxu0 %v298
        %541 = vmatprep.subr.mxu0 %v301
        %542 = vmatpush1.msra.mxu0 %v300
        %543 = vmatprep.subr.mxu0 %v303
        %544 = vmatpush1.msra.mxu0 %v302
        %545 = vmatprep.subr.mxu0 %v305
        %546 = vmatpush1.msra.mxu0 %v304
        %547 = vmatprep.subr.mxu0 0.0
        %548 = vmatpush1.msra.mxu0 0.0
        %549 = vmatprep.subr.mxu0 0.0
        %550 = vmatpush1.msra.mxu0 0.0
        %551 = vmatprep.subr.mxu0 0.0
        %552 = vmatpush1.msra.mxu0 0.0
        %553 = vmatprep.subr.mxu0 0.0
        %554 = vmatpush1.msra.mxu0 0.0
        %555 = vmatprep.subr.mxu0 0.0
        %556 = vmatpush1.msra.mxu0 0.0
        %557 = vmatprep.subr.mxu0 0.0
        %558 = vmatpush1.msra.mxu0 0.0
        %559 = vmatprep.subr.mxu0 0.0
        %560 = vmatpush1.msra.mxu0 0.0
        %561 = vmatprep.subr.mxu0 0.0
        %562 = vmatpush1.msra.mxu0 0.0
        %563 = vmatprep.subr.mxu0 0.0
        %564 = vmatpush1.msra.mxu0 0.0
        %565 = vmatprep.subr.mxu0 0.0
        %566 = vmatpush1.msra.mxu0 0.0
        %567 = vmatprep.subr.mxu0 0.0
        %568 = vmatpush1.msra.mxu0 0.0
        %569 = vmatprep.subr.mxu0 0.0
        %570 = vmatpush1.msra.mxu0 0.0
        %571 = vmatprep.subr.mxu0 0.0
        %572 = vmatpush1.msra.mxu0 0.0
        %573 = vmatprep.subr.mxu0 0.0
        %574 = vmatpush1.msra.mxu0 0.0
        %575 = vmatprep.subr.mxu0 0.0
        %576 = vmatpush1.msra.mxu0 0.0
        %577 = vmatprep.subr.mxu0 0.0
        %578 = vmatpush1.msra.mxu0 0.0
        %579 = vmatprep.subr.mxu0 0.0
        %580 = vmatpush1.msra.mxu0 0.0
        %581 = vmatprep.subr.mxu0 0.0
        %582 = vmatpush1.msra.mxu0 0.0
        %583 = vmatprep.subr.mxu0 0.0
        %584 = vmatpush1.msra.mxu0 0.0
        %585 = vmatprep.subr.mxu0 0.0
        %586 = vmatpush1.msra.mxu0 0.0
        %587 = vmatprep.subr.mxu0 0.0
        %588 = vmatpush1.msra.mxu0 0.0
        %589 = vmatprep.subr.mxu0 0.0
        %590 = vmatpush1.msra.mxu0 0.0
        %591 = vmatprep.subr.mxu0 0.0
        %592 = vmatpush1.msra.mxu0 0.0
        %593 = vmatprep.subr.mxu0 0.0
        %594 = vmatpush1.msra.mxu0 0.0
        %595 = vmatprep.subr.mxu0 0.0
        %596 = vmatpush1.msra.mxu0 0.0
        %597 = vmatprep.subr.mxu0 0.0
        %598 = vmatpush1.msra.mxu0 0.0
        %599 = vmatprep.subr.mxu0 0.0
        %600 = vmatpush1.msra.mxu0 0.0
        %601 = vmatprep.subr.mxu0 0.0
        %602 = vmatpush1.msra.mxu0 0.0
        %603 = vmatprep.mubr.f32.mxu0 0.0
        %604 = vmatmul.mubr.f32.gmra.mrb[0].mxu0 %v537
        %v605 = vpop.f32.mrb[0].mxu0
        %v606 = vadd.f32 %v535, %v605
        %v607 = vpop.f32.mrb[0].mxu0
        %v608 = vadd.f32 %v535, %v607
        %609 = vdwg.mxu0
        %v610 = vxor.u32 %v606, 2147483648
        %v611 = vxor.u32 %v608, 2147483648
        %v612 = vmul.f32 %v610, 1.442695
        %v613 = vpow.pop %v612
        %v614 = vmul.f32 %v611, 1.442695
        %v615 = vpow.pop %v614
        %v616 = vadd.f32 %v613, 1.0
        %v617 = vadd.f32 %v615, 1.0
        %v618 = vrcp.pop %v616
        %v619 = vmul.f32 1.0, %v618
        %v620 = vrcp.pop %v617
        %v621 = vmul.f32 1.0, %v620
        %623 = vset.pattern.permute.xlu0 0
        %624 = vperm.xlu0 %623, %v526
        %v625 = vpop.permute.xlu0 %624
        %628 = vset.pattern.permute.xlu0 0
        %629 = vperm.xlu0 %628, %v528
        %v630 = vpop.permute.xlu0 %629
        %633 = vset.pattern.permute.xlu0 0
        %634 = vperm.xlu0 %633, %v530
        %v635 = vpop.permute.xlu0 %634
        %638 = vset.pattern.permute.xlu0 0
        %639 = vperm.xlu0 %638, %v532
        %v640 = vpop.permute.xlu0 %639
        %v642 = vlaneseq
        %v643 = vshrl.u32 %v642, 7
        %v644 = vsub.s32 0, %v643
        %v645 = vrot.slane %v619, %v644
        %v646 = vlaneseq
        %v647 = vshrl.u32 %v646, 7
        %v648 = vsub.s32 0, %v647
        %v649 = vrot.slane %v621, %v648
        %v650 = vadd.f32 %v625, %v645
        %v651 = vadd.f32 %v625, %v649
        %v652 = vadd.f32 %v630, %v645
        %v653 = vadd.f32 %v630, %v649
        %v654 = vadd.f32 %v635, %v645
        %v655 = vadd.f32 %v635, %v649
        %v656 = vadd.f32 %v640, %v645
        %v657 = vadd.f32 %v640, %v649
        %v658 = vmul.f32 %v298, %v650
        %v659 = vmul.f32 %v299, %v651
        %v660 = vmul.f32 %v300, %v652
        %v661 = vmul.f32 %v301, %v653
        %v662 = vmul.f32 %v302, %v654
        %v663 = vmul.f32 %v303, %v655
        %v664 = vmul.f32 %v304, %v656
        %v665 = vmul.f32 %v305, %v657
        %666 = vst [vmem:[%s297] sm:$0xff] %v658
        %667 = vst [vmem:[%s297 + $0x8] sm:$0xff] %v659
        %668 = vst [vmem:[%s297 + $0x10] sm:$0xff] %v660
        %669 = vst [vmem:[%s297 + $0x18] sm:$0xff] %v661
        %670 = vst [vmem:[%s297 + $0x20] sm:$0xff] %v662
        %671 = vst [vmem:[%s297 + $0x28] sm:$0xff] %v663
        %672 = vst [vmem:[%s297 + $0x30] sm:$0xff] %v664
        %673 = vst [vmem:[%s297 + $0x38] sm:$0xff] %v665
        %s674 = sand.u32 %s185, 1
        %s675 = scalar_lea.sflag [#allocation5], %s674
        %s676 = sand.u32 %s185, 1
        %s677 = smul.addr %s676, 64
        %s678 = scalar_lea.vmem [#allocation6], %s677
        // Predicated region
        $region53: #{tpu_custom_call.1} parent=47 // pred_check
          %p679 = pneg %p195
        $region54: #{tpu_custom_call.1} parent=47 // pred_check_branch
          %681 = sbr.rel (%p679) target = $region56
        $region55: #{tpu_custom_call.1} parent=47 // pred_region
          %s683 = ssub.s32 1024, 1024
          %684 = vsyncadd %s675, %s683
          %s685 = smul.addr %s25, 8
          %s686 = smul.addr %s685, 128
          %s687 = scalar_lea.hbm %s7, %s686
          %s688 = sshll.u32 %s678, 4
          %s689 = int_to_ptr.vmem [resolvable:$true] %s688
          %694 = dma.vmem_to_hbm [thread:$0]  %s689, 1024, %s687, %s675, 256, 256, 16
        $region56: #{tpu_custom_call.1} parent=47 // pred_fallthru
          _
      $region48: #{tpu_custom_call.1} parent=5 // pred_fallthru
        _
      %p695 = scmp.le.s32.totalorder 2, %s20
      // Predicated region
      $region57: #{tpu_custom_call.1} parent=5 // pred_check
        %p696 = pneg %p695
      $region58: #{tpu_custom_call.1} parent=5 // pred_check_branch
        %698 = sbr.rel (%p696) target = $region60
      $region59: #{tpu_custom_call.1} parent=5 // pred_region
        %s699 = ssub.s32 %s20, 2
        // Predicated region
        $region61: #{tpu_custom_call.1} parent=59 // pred_check
          %p700 = pneg %p201
        $region62: #{tpu_custom_call.1} parent=59 // pred_check_branch
          %702 = sbr.rel (%p700) target = $region64
        $region63: #{tpu_custom_call.1} parent=59 // pred_region
          %s703 = sand.u32 %s186, 1
          %s704 = scalar_lea.sflag [#allocation5], %s703
          %s705 = sand.u32 %s186, 1
          %s706 = smul.addr %s705, 64
          %s707 = scalar_lea.vmem [#allocation6], %s706
          %708 = dma.done %s704, 1024
        $region64: #{tpu_custom_call.1} parent=59 // pred_fallthru
          _
      $region60: #{tpu_custom_call.1} parent=5 // pred_fallthru
        _
    $region6: #{tpu_custom_call.1} parent=1 // loop_footer
      %s24 = sadd.s32 1, %s20
    $region7: #{tpu_custom_call.1} parent=1 // loop_footer_branch
      %19 = sbr.rel target = $region3
    $region8: #{tpu_custom_call.1} parent=1 // loop_exit
      _
    %709 = vsyncpa [#allocation4], 1
    %s710 = scalar_lea.sflag [#allocation4], 1
    %711 = vsyncpa %s710, 1
    %712 = vsyncpa [#allocation5], 1
    %s713 = scalar_lea.sflag [#allocation5], 1
    %714 = vsyncpa %s713, 1

</llo_original>
